<compile_context>
chip_gen: v7x
topology: tpu7x:2x2x1
jax: 0.10.0
libtpu: 0.0.40
codegen_flags: <defaults>
</compile_context>

<pallas_src>
import functools
import math

import jax
import jax.numpy as jnp
from jax.experimental import pallas as pl
from jax.experimental.pallas import tpu as pltpu

# ---- model / example dimensions (small, consistent with the module) --------
B = 2                                   # batch
C_IN = 3                                # image channels
H = W = 16                              # spatial size
PATCH = 4                               # stand-in patch size
N_TOK = (H // PATCH) * (W // PATCH)     # 16 tokens per image
P_DIM = C_IN * PATCH * PATCH            # 48 real features per patch
K_PAD = 128                             # lane-aligned pooled dim (48 real + 1 bias-one + zeros)
DIM = 128                               # backbone embedding dim (default dim=128)
HIDDEN = 512                            # Mlp hidden_features=512
NUM_CLASSES = 10                        # > 2 -> Mlp out_features == num_classes
CLS_SL = 16                             # class dim padded on the sublane axis (10 -> 16)

WEIGHT_DTYPE = jnp.bfloat16


def _full_spec(shape):
    """BlockSpec covering the whole array for the trivial grid=(1,)."""
    nd = len(shape)
    return pl.BlockSpec(shape, lambda i, _nd=nd: (0,) * _nd)


# ---------------------------------------------------------------------------
# Exact-erf GELU (matches torch nn.GELU() default) without relying on an
# erf lowering: Abramowitz & Stegun 7.1.26, |abs err| < 1.5e-7 (f32 noise).
# ---------------------------------------------------------------------------
def _erf(z):
    p = 0.3275911
    a1, a2, a3, a4, a5 = (0.254829592, -0.284496736, 1.421413741,
                          -1.453152027, 1.061405429)
    s = jnp.where(z >= 0.0, 1.0, -1.0)
    za = jnp.abs(z)
    t = 1.0 / (1.0 + p * za)
    poly = ((((a5 * t + a4) * t + a3) * t + a2) * t + a1) * t
    return s * (1.0 - poly * jnp.exp(-za * za))


def _gelu_exact(x):
    return 0.5 * x * (1.0 + _erf(x * (1.0 / math.sqrt(2.0))))


# ---------------------------------------------------------------------------
# Fused kernel: (pooled @ fused-embed/fc1) -> GELU -> fc2 -> [masked softmax]
# ---------------------------------------------------------------------------
def _make_kernel(want_probs):
    def kernel(pooled_ref, wf_ref, w2t_ref, b2_ref, out_ref):
        # Fused backbone-embed + Mlp fc1; bias lives in row P_DIM of wf
        # (pooled column P_DIM is the constant 1.0).  bf16 x bf16 -> f32 acc.
        h = jnp.dot(pooled_ref[...], wf_ref[...],
                    preferred_element_type=jnp.float32)              # (B, HIDDEN) f32
        h = _gelu_exact(h)                                           # f32 math (v5e EUP/VPU)

        # Mlp fc2: classes on the sublane axis of w2t -> contract the HIDDEN dims.
        logits = jax.lax.dot_general(
            h.astype(w2t_ref.dtype), w2t_ref[...],
            dimension_numbers=(((1,), (1,)), ((), ())),
            preferred_element_type=jnp.float32) + b2_ref[...]        # (B, CLS_SL) f32

        if want_probs:
            # Padded logits are exactly 0 -> must mask before the max/exp.
            col = jax.lax.broadcasted_iota(jnp.int32, (B, CLS_SL), 1)
            masked = jnp.where(col < NUM_CLASSES, logits, -1e30)
            m = jnp.max(masked, axis=1, keepdims=True)
            e = jnp.exp(masked - m)
            out_ref[...] = e / jnp.sum(e, axis=1, keepdims=True)     # exact divide
        else:
            out_ref[...] = logits
    return kernel


_COST = pl.CostEstimate(
    flops=2 * B * K_PAD * HIDDEN + 2 * B * HIDDEN * CLS_SL,
    transcendentals=B * HIDDEN + B * CLS_SL,
    bytes_accessed=(2 * (B * K_PAD) + 2 * (K_PAD * HIDDEN)
                    + 2 * (CLS_SL * HIDDEN) + 4 * CLS_SL + 4 * (B * CLS_SL)),
)


def _build_call(want_probs):
    return pl.pallas_call(
        _make_kernel(want_probs),
        out_shape=jax.ShapeDtypeStruct((B, CLS_SL), jnp.float32),
        grid=(1,),
        in_specs=[
            _full_spec((B, K_PAD)),        # pooled (bf16)
            _full_spec((K_PAD, HIDDEN)),   # fused embed+fc1 weight (bf16, bias in row P_DIM)
            _full_spec((CLS_SL, HIDDEN)),  # fc2 weight, transposed, sublane-padded (bf16)
            _full_spec((1, CLS_SL)),       # fc2 bias (f32)
        ],
        out_specs=_full_spec((B, CLS_SL)),
        compiler_params=pltpu.CompilerParams(
            dimension_semantics=("arbitrary",),
            # let XLA fuse the tiny patchify/mean/pad/cast into the custom call
            allow_input_fusion=[True, False, False, False],
        ),
        cost_estimate=_COST,
    )


# ---------------------------------------------------------------------------
# Wrapper
# ---------------------------------------------------------------------------
def _pool_patches(x):
    """(B, C, H, W) -> (B, K_PAD) f32: patchify, mean over tokens, pad 48->128.

    Column P_DIM is a constant 1.0 that selects the fused-bias row of w_fused.
    Valid because the backbone stand-in and the mean-pool are both linear.
    """
    b, c, h, w = x.shape
    p = x.reshape(b, c, h // PATCH, PATCH, w // PATCH, PATCH)
    p = p.transpose(0, 2, 4, 1, 3, 5).reshape(b, (h // PATCH) * (w // PATCH), P_DIM)
    pooled = jnp.mean(p, axis=1)                                     # (B, P_DIM)
    ones = jnp.ones((b, 1), pooled.dtype)
    zeros = jnp.zeros((b, K_PAD - P_DIM - 1), pooled.dtype)
    return jnp.concatenate([pooled, ones, zeros], axis=1)            # (B, K_PAD)


@functools.partial(jax.jit, static_argnames=("return_logits",))
def tsd_classifier_forward(x, params, return_logits=False):
    pooled = _pool_patches(x.astype(jnp.float32)).astype(WEIGHT_DTYPE)
    out = _build_call(want_probs=not return_logits)(
        pooled, params["w_fused"], params["w2t"], params["b2"])
    return out[:, :NUM_CLASSES]


# ---------------------------------------------------------------------------
# Pure-JAX reference (same bf16 cast points as the kernel) for a sanity check.
# ---------------------------------------------------------------------------
def _reference_forward(x, params, return_logits=False):
    pooled = _pool_patches(x.astype(jnp.float32)).astype(WEIGHT_DTYPE)
    h = jnp.dot(pooled.astype(jnp.float32), params["w_fused"].astype(jnp.float32))
    h = _gelu_exact(h)
    logits = (jnp.dot(h.astype(WEIGHT_DTYPE).astype(jnp.float32),
                      params["w2t"].astype(jnp.float32).T)
              + params["b2"])[:, :NUM_CLASSES]
    if return_logits:
        return logits
    return jax.nn.softmax(logits, axis=1)


# ---------------------------------------------------------------------------
# Deterministic parameter init (PyTorch-Linear-style uniform(-1/sqrt(fan_in),.))
# plus offline fusion/padding so the kernel only ever sees 4 packed slabs.
# ---------------------------------------------------------------------------
def init_params(key):
    k = jax.random.split(key, 6)

    def lin(kw, kb, fan_in, fan_out):
        bound = 1.0 / math.sqrt(fan_in)
        w = jax.random.uniform(kw, (fan_in, fan_out), jnp.float32, -bound, bound)
        b = jax.random.uniform(kb, (1, fan_out), jnp.float32, -bound, bound)
        return w, b

    w_embed, b_embed = lin(k[0], k[1], P_DIM, DIM)      # backbone stand-in
    w1, b1 = lin(k[2], k[3], DIM, HIDDEN)               # Mlp fc1
    w2, b2 = lin(k[4], k[5], HIDDEN, NUM_CLASSES)       # Mlp fc2

    # Fuse linear embed into fc1: pooled @ (We@W1) + (be@W1 + b1).
    w_fused = w_embed @ w1                               # (P_DIM, HIDDEN)
    b_fused = b_embed @ w1 + b1                          # (1, HIDDEN)
    # Pad K 48 -> 128; fold the fused bias into row P_DIM (pooled col P_DIM == 1).
    w_fused = jnp.concatenate(
        [w_fused, b_fused,
         jnp.zeros((K_PAD - P_DIM - 1, HIDDEN), jnp.float32)], axis=0)

    # fc2: classes on the sublane axis, padded 10 -> 16 (not 128).
    w2t = jnp.pad(w2.T, ((0, CLS_SL - NUM_CLASSES), (0, 0)))   # (CLS_SL, HIDDEN)
    b2p = jnp.pad(b2, ((0, 0), (0, CLS_SL - NUM_CLASSES)))     # (1, CLS_SL)

    return {
        "w_fused": w_fused.astype(WEIGHT_DTYPE),
        "w2t": w2t.astype(WEIGHT_DTYPE),
        "b2": b2p,                                      # f32, added post-accumulate
    }


if __name__ == "__main__":
    key = jax.random.PRNGKey(0)
    kx, kp = jax.random.split(key)
    x = jax.random.normal(kx, (B, C_IN, H, W), jnp.float32)
    params = init_params(kp)

    probs = tsd_classifier_forward(x, params)                       # softmax probs
    logits = tsd_classifier_forward(x, params, return_logits=True)  # raw logits
    jax.block_until_ready((probs, logits))

    assert probs.shape == (B, NUM_CLASSES)
    assert logits.shape == (B, NUM_CLASSES)
    assert bool(jnp.all(jnp.isfinite(logits)))
    assert bool(jnp.allclose(jnp.sum(probs, axis=1), 1.0, atol=1e-3))

    # Cross-check against the pure-JAX reference (same bf16 inputs).
    ref_probs = _reference_forward(x, params)
    ref_logits = _reference_forward(x, params, return_logits=True)
    assert bool(jnp.allclose(logits, ref_logits, atol=1e-2, rtol=1e-2))
    assert bool(jnp.allclose(probs, ref_probs, atol=1e-2, rtol=1e-2))

    print("KERNEL_OK")
</pallas_src>

<mosaic_0001>
module attributes {stable_mosaic.version = 11 : i64} {
  func.func @kernel(%arg0: i32, %arg1: memref<2x128xbf16, #tpu.memory_space<vmem>>, %arg2: memref<128x512xbf16, #tpu.memory_space<vmem>>, %arg3: memref<16x512xbf16, #tpu.memory_space<vmem>>, %arg4: memref<1x16xf32, #tpu.memory_space<vmem>>, %arg5: memref<2x16xf32, #tpu.memory_space<vmem>>) attributes {dimension_semantics = [#tpu.dimension_semantics<arbitrary>], iteration_bounds = array<i64: 1>, scalar_prefetch = 0 : i64, scratch_operands = 0 : i64, tpu.core_type = #tpu.core_type<tc>, window_params = [{pipeline_mode = #tpu.pipeline_mode<synchronous>, transform_indices = @transform_0, window_bounds = array<i64: 2, 128>}, {pipeline_mode = #tpu.pipeline_mode<synchronous>, transform_indices = @transform_1, window_bounds = array<i64: 128, 512>}, {pipeline_mode = #tpu.pipeline_mode<synchronous>, transform_indices = @transform_2, window_bounds = array<i64: 16, 512>}, {pipeline_mode = #tpu.pipeline_mode<synchronous>, transform_indices = @transform_3, window_bounds = array<i64: 1, 16>}, {pipeline_mode = #tpu.pipeline_mode<synchronous>, transform_indices = @transform_4, window_bounds = array<i64: 2, 16>}]} {
    %c0 = arith.constant 0 : index
    %c0_0 = arith.constant 0 : index
    %0 = vector.load %arg1[%c0, %c0_0] : memref<2x128xbf16, #tpu.memory_space<vmem>>, vector<2x128xbf16>
    %c0_1 = arith.constant 0 : index
    %c0_2 = arith.constant 0 : index
    %1 = vector.load %arg2[%c0_1, %c0_2] : memref<128x512xbf16, #tpu.memory_space<vmem>>, vector<128x512xbf16>
    %cst = arith.constant dense<0.000000e+00> : vector<2x512xf32>
    %2 = tpu.matmul %0, %1, %cst {dimension_numbers = #tpu.dot_dimension_numbers<[1], [0], [0], [1], [0, 0, 1, 1], [], []>} : vector<2x128xbf16>, vector<128x512xbf16>, vector<2x512xf32> -> vector<2x512xf32>
    %cst_3 = arith.constant 5.000000e-01 : f32
    %3 = vector.broadcast %cst_3 : f32 to vector<2x512xf32>
    %4 = arith.mulf %3, %2 : vector<2x512xf32>
    %cst_4 = arith.constant 0.707106769 : f32
    %5 = vector.broadcast %cst_4 : f32 to vector<2x512xf32>
    %6 = arith.mulf %2, %5 : vector<2x512xf32>
    %cst_5 = arith.constant 0.000000e+00 : f32
    %7 = vector.broadcast %cst_5 : f32 to vector<2x512xf32>
    %8 = arith.cmpf oge, %6, %7 : vector<2x512xf32>
    %cst_6 = arith.constant 1.000000e+00 : f32
    %cst_7 = arith.constant -1.000000e+00 : f32
    %9 = vector.broadcast %cst_6 : f32 to vector<2x512xf32>
    %10 = vector.broadcast %cst_7 : f32 to vector<2x512xf32>
    %11 = arith.select %8, %9, %10 : vector<2x512xi1>, vector<2x512xf32>
    %12 = math.absf %6 : vector<2x512xf32>
    %cst_8 = arith.constant 0.327591091 : f32
    %13 = vector.broadcast %cst_8 : f32 to vector<2x512xf32>
    %14 = arith.mulf %13, %12 : vector<2x512xf32>
    %cst_9 = arith.constant 1.000000e+00 : f32
    %15 = vector.broadcast %cst_9 : f32 to vector<2x512xf32>
    %16 = arith.addf %15, %14 : vector<2x512xf32>
    %cst_10 = arith.constant 1.000000e+00 : f32
    %17 = vector.broadcast %cst_10 : f32 to vector<2x512xf32>
    %18 = arith.divf %17, %16 : vector<2x512xf32>
    %cst_11 = arith.constant 1.06140542 : f32
    %19 = vector.broadcast %cst_11 : f32 to vector<2x512xf32>
    %20 = arith.mulf %19, %18 : vector<2x512xf32>
    %cst_12 = arith.constant -1.45315206 : f32
    %21 = vector.broadcast %cst_12 : f32 to vector<2x512xf32>
    %22 = arith.addf %20, %21 : vector<2x512xf32>
    %23 = arith.mulf %22, %18 : vector<2x512xf32>
    %cst_13 = arith.constant 1.42141378 : f32
    %24 = vector.broadcast %cst_13 : f32 to vector<2x512xf32>
    %25 = arith.addf %23, %24 : vector<2x512xf32>
    %26 = arith.mulf %25, %18 : vector<2x512xf32>
    %cst_14 = arith.constant -0.284496725 : f32
    %27 = vector.broadcast %cst_14 : f32 to vector<2x512xf32>
    %28 = arith.addf %26, %27 : vector<2x512xf32>
    %29 = arith.mulf %28, %18 : vector<2x512xf32>
    %cst_15 = arith.constant 0.254829586 : f32
    %30 = vector.broadcast %cst_15 : f32 to vector<2x512xf32>
    %31 = arith.addf %29, %30 : vector<2x512xf32>
    %32 = arith.mulf %31, %18 : vector<2x512xf32>
    %cst_16 = arith.constant 0.000000e+00 : f32
    %33 = vector.broadcast %cst_16 : f32 to vector<2x512xf32>
    %34 = arith.subf %33, %12 : vector<2x512xf32>
    %35 = arith.mulf %34, %12 : vector<2x512xf32>
    %36 = math.exp %35 : vector<2x512xf32>
    %37 = arith.mulf %32, %36 : vector<2x512xf32>
    %cst_17 = arith.constant 1.000000e+00 : f32
    %38 = vector.broadcast %cst_17 : f32 to vector<2x512xf32>
    %39 = arith.subf %38, %37 : vector<2x512xf32>
    %40 = arith.mulf %11, %39 : vector<2x512xf32>
    %cst_18 = arith.constant 1.000000e+00 : f32
    %41 = vector.broadcast %cst_18 : f32 to vector<2x512xf32>
    %42 = arith.addf %41, %40 : vector<2x512xf32>
    %43 = arith.mulf %4, %42 : vector<2x512xf32>
    %44 = arith.truncf %43 : vector<2x512xf32> to vector<2x512xbf16>
    %c0_19 = arith.constant 0 : index
    %c0_20 = arith.constant 0 : index
    %45 = vector.load %arg3[%c0_19, %c0_20] : memref<16x512xbf16, #tpu.memory_space<vmem>>, vector<16x512xbf16>
    %cst_21 = arith.constant dense<0.000000e+00> : vector<2x16xf32>
    %46 = tpu.matmul %44, %45, %cst_21 {dimension_numbers = #tpu.dot_dimension_numbers<[1], [1], [0], [0], [0, 0, 1, 0], [], []>} : vector<2x512xbf16>, vector<16x512xbf16>, vector<2x16xf32> -> vector<2x16xf32>
    %c0_22 = arith.constant 0 : index
    %c0_23 = arith.constant 0 : index
    %47 = vector.load %arg4[%c0_22, %c0_23] : memref<1x16xf32, #tpu.memory_space<vmem>>, vector<1x16xf32>
    %48 = vector.broadcast %47 : vector<1x16xf32> to vector<2x16xf32>
    %49 = arith.addf %46, %48 : vector<2x16xf32>
    %50 = tpu.iota {dimensions = array<i32: 1>} : vector<2x16xi32>
    %c10_i32 = arith.constant 10 : i32
    %51 = vector.broadcast %c10_i32 : i32 to vector<2x16xi32>
    %52 = arith.cmpi slt, %50, %51 : vector<2x16xi32>
    %cst_24 = arith.constant -1.000000e+30 : f32
    %53 = vector.broadcast %cst_24 : f32 to vector<2x16xf32>
    %54 = arith.select %52, %49, %53 : vector<2x16xi1>, vector<2x16xf32>
    %cst_25 = arith.constant dense<0xFF800000> : vector<2xf32>
    %55 = vector.multi_reduction <maximumf>, %54, %cst_25 [1] : vector<2x16xf32> to vector<2xf32>
    %56 = vector.shape_cast %55 : vector<2xf32> to vector<2x1xf32>
    %57 = vector.broadcast %56 : vector<2x1xf32> to vector<2x16xf32>
    %58 = arith.subf %54, %57 : vector<2x16xf32>
    %59 = math.exp %58 : vector<2x16xf32>
    %cst_26 = arith.constant dense<0.000000e+00> : vector<2xf32>
    %60 = vector.multi_reduction <add>, %59, %cst_26 [1] : vector<2x16xf32> to vector<2xf32>
    %61 = vector.shape_cast %60 : vector<2xf32> to vector<2x1xf32>
    %62 = vector.broadcast %61 : vector<2x1xf32> to vector<2x16xf32>
    %63 = arith.divf %59, %62 : vector<2x16xf32>
    %c0_27 = arith.constant 0 : index
    %c0_28 = arith.constant 0 : index
    %64 = vector.load %arg5[%c0_27, %c0_28] : memref<2x16xf32, #tpu.memory_space<vmem>>, vector<2x16xf32>
    tpu.vector_store %arg5[%c0_27, %c0_28], %63 {strides = array<i32>} : memref<2x16xf32, #tpu.memory_space<vmem>>, vector<2x16xf32>,
    return
  }
  func.func @transform_0(%arg0: i32) -> (i32, i32) {
    %c0_i32 = arith.constant 0 : i32
    %c0_i32_0 = arith.constant 0 : i32
    %c0_i32_1 = arith.constant 0 : i32
    return %c0_i32, %c0_i32_0 : i32, i32
  }
  func.func @transform_1(%arg0: i32) -> (i32, i32) {
    %c0_i32 = arith.constant 0 : i32
    %c0_i32_0 = arith.constant 0 : i32
    %c0_i32_1 = arith.constant 0 : i32
    return %c0_i32, %c0_i32_0 : i32, i32
  }
  func.func @transform_2(%arg0: i32) -> (i32, i32) {
    %c0_i32 = arith.constant 0 : i32
    %c0_i32_0 = arith.constant 0 : i32
    %c0_i32_1 = arith.constant 0 : i32
    return %c0_i32, %c0_i32_0 : i32, i32
  }
  func.func @transform_3(%arg0: i32) -> (i32, i32) {
    %c0_i32 = arith.constant 0 : i32
    %c0_i32_0 = arith.constant 0 : i32
    %c0_i32_1 = arith.constant 0 : i32
    return %c0_i32, %c0_i32_0 : i32, i32
  }
  func.func @transform_4(%arg0: i32) -> (i32, i32) {
    %c0_i32 = arith.constant 0 : i32
    %c0_i32_0 = arith.constant 0 : i32
    %c0_i32_1 = arith.constant 0 : i32
    return %c0_i32, %c0_i32_0 : i32, i32
  }
}

</mosaic_0001>

<llo_original>
// kernel: tsd_classifier_forward.2
$region0: #{tsd_classifier_forward.2}
  #allocation0 [shape = 'u32[]', space=smem, size = 0x4, offset = 0x4, fixed_abs, tag = 'smem constant byte address 0x4 - core index']
  #allocation1 [shape = 'u32[144,128]{1,0:T(1,128)}', space=vmem, size = 0x12000, scoped, tag = 'internal scratch']
  #allocation2 [shape = 'u32[2048]{0}', space=vmem, size = 0x2000, scoped, tag = 'scoped memory for tsd_classifier_forward.2']
  #allocation3 [shape = 'u32[2048]{0}', space=vmem, size = 0x2000, scoped, tag = 'scoped memory for tsd_classifier_forward.2']
  #allocation4 [shape = 'u32[2048]{0}', space=vmem, size = 0x2000, scoped, tag = 'scoped memory for tsd_classifier_forward.2']
  #allocation5 [shape = 'u32[2048]{0}', space=vmem, size = 0x2000, scoped, tag = 'scoped memory for tsd_classifier_forward.2']
  #allocation6 [shape = 'u32[2048]{0}', space=vmem, size = 0x2000, scoped, tag = 'scoped memory for tsd_classifier_forward.2']
  %s0 = inlined_call_operand.vmem [shape: bf16[128,512], index: 0, kind: input, shape index: {}]
  %s1 = inlined_call_operand.vmem [shape: bf16[16,512], index: 1, kind: input, shape index: {}]
  %s2 = inlined_call_operand.vmem [shape: f32[1,16], index: 2, kind: input, shape index: {}]
  %s3 = inlined_call_operand.vmem [shape: bf16[2,48], index: 3, kind: input, shape index: {}]
  %s4 = inlined_call_operand.<no memory space> [shape: bf16[], index: 4, kind: input, shape index: {}]
  %s5 = inlined_call_operand.vmem [shape: bf16[128], index: 5, kind: input, shape index: {}]
  %s6 = inlined_call_operand.vmem [shape: bf16[128], index: 6, kind: input, shape index: {}]
  %s7 = inlined_call_operand.hbm [shape: f32[2,16], index: 7, kind: output, shape index: {}]
  %s8 = sld [smem:[#allocation0]]
  $region34: #{tsd_classifier_forward.2} parent=0
    _
  %s10 = ssub.s32 1, %s8
  %s11 = scalar_select 0, %s10, %s8
  %v12 = vstv %s4
  %v13 = vunpack.i.l.bf16 %v12
  %v15 = vunpack.i.h.bf16 %v12
  $region1: #{tsd_classifier_forward.2} parent=0
    #allocation7 [shape = 'u8[1024]{0}', space=vmem, size = 0x400, scoped, tag = 'output window, operand 0, single buffered']
    #allocation8 [shape = 's32[1]{0}', space=sflag, size = 0x4, scoped, tag = 'scoped memory for tsd_classifier_forward.2']
    #allocation9 [shape = 'u8[512]{0}', space=vmem, size = 0x400, dematerialized = true, scoped, tag = 'FusionAdapter Buffer %fusion.1 = bf16[2,128]{1,0:T(2,128)(2,1)} fusion(%param_3.6, %param_4.4, %param_5.3, %param_6.2), kind=kLoop, calls=%fused_computation.2.clone, metadata={op_name="jit(tsd_classifier_forward)/concatenate" stack_frame_id=12}']
    %17 = vsyncpa [#allocation8], 0
    // Predicated region
    $region2: #{tsd_classifier_forward.2} parent=1 // pred_check
      _
    $region3: #{tsd_classifier_forward.2} parent=1 // pred_check_branch
      %19 = sbr.rel (0) target = $region5
    $region4: #{tsd_classifier_forward.2} parent=1 // pred_region
      _
    $region5: #{tsd_classifier_forward.2} parent=1 // pred_fallthru
      _
    // Predicated region
    $region6: #{tsd_classifier_forward.2} parent=1 // pred_check
      _
    $region7: #{tsd_classifier_forward.2} parent=1 // pred_check_branch
      %21 = sbr.rel (0) target = $region9
    $region8: #{tsd_classifier_forward.2} parent=1 // pred_region
      _
    $region9: #{tsd_classifier_forward.2} parent=1 // pred_fallthru
      _
    // Predicated region
    $region10: #{tsd_classifier_forward.2} parent=1 // pred_check
      _
    $region11: #{tsd_classifier_forward.2} parent=1 // pred_check_branch
      %23 = sbr.rel (0) target = $region13
    $region12: #{tsd_classifier_forward.2} parent=1 // pred_region
      _
    $region13: #{tsd_classifier_forward.2} parent=1 // pred_fallthru
      _
    // Predicated region
    $region14: #{tsd_classifier_forward.2} parent=1 // pred_check
      _
    $region15: #{tsd_classifier_forward.2} parent=1 // pred_check_branch
      %25 = sbr.rel (0) target = $region17
    $region16: #{tsd_classifier_forward.2} parent=1 // pred_region
      _
    $region17: #{tsd_classifier_forward.2} parent=1 // pred_fallthru
      _
    // Predicated region
    $region18: #{tsd_classifier_forward.2} parent=1 // pred_check
      _
    $region19: #{tsd_classifier_forward.2} parent=1 // pred_check_branch
      %27 = sbr.rel (0) target = $region21
    $region20: #{tsd_classifier_forward.2} parent=1 // pred_region
      _
    $region21: #{tsd_classifier_forward.2} parent=1 // pred_fallthru
      _
    // Predicated region
    $region22: #{tsd_classifier_forward.2} parent=1 // pred_check
      _
    $region23: #{tsd_classifier_forward.2} parent=1 // pred_check_branch
      %29 = sbr.rel (0) target = $region25
    $region24: #{tsd_classifier_forward.2} parent=1 // pred_region
      _
    $region25: #{tsd_classifier_forward.2} parent=1 // pred_fallthru
      _
    %s31 = sor.u32 3, 1
    %s32 = sand.u32 %s31, 1
    %v33 = vld [vmem:[%s3] sm:%s32]
    %v34 = vunpack.c.l.bf16 %v33
    %v35 = vunpack.c.h.bf16 %v33
    %v36 = vlaneseq
    %v37 = vshrl.u32 %v36, 7
    %vm39 = vcmp.lt.s32.totalorder %v37, 2
    %v40 = vsel %vm39, %v34, %v13
    %v41 = vlaneseq
    %v42 = vand.u32 %v41, 127
    %vm44 = vcmp.lt.s32.totalorder %v42, 48
    %v45 = vsel %vm44, %v40, %v13
    %v46 = vld [vmem:[%s5] ss:$0 sm:$0xff]
    %v47 = vunpack.i.l.bf16 %v46
    %v49 = vunpack.i.h.bf16 %v46
    %v51 = vld [vmem:[%s6] ss:$0 sm:$0xff]
    %v52 = vunpack.i.l.bf16 %v51
    %v54 = vunpack.i.h.bf16 %v51
    %56 = xla_tuple %v45, %v52
    %57 = xla_tuple %56
    %v58 = vmax.f32 %v45, %v52
    %59 = xla_tuple %v58
    %60 = xla_tuple %v58, %v47
    %61 = xla_tuple %60
    %v62 = vmax.f32 %v58, %v47
    %63 = xla_tuple %v62
    %v64 = vpack.c.bf16 0.0, %v62
    %66 = vst [vmem:[#allocation9] sm:$0x1] %v64
    %v68 = vld [vmem:[#allocation9] sm:$0x1]
    %v69 = vld [vmem:[%s0] sm:$0xff]
    %v70 = vld [vmem:[%s0 + $0x8] sm:$0xff]
    %v71 = vld [vmem:[%s0 + $0x10] sm:$0xff]
    %v72 = vld [vmem:[%s0 + $0x18] sm:$0xff]
    %v73 = vld [vmem:[%s0 + $0x20] sm:$0xff]
    %v74 = vld [vmem:[%s0 + $0x28] sm:$0xff]
    %v75 = vld [vmem:[%s0 + $0x30] sm:$0xff]
    %v76 = vld [vmem:[%s0 + $0x38] sm:$0xff]
    %v77 = vld [vmem:[%s0 + $0x40] sm:$0xff]
    %v78 = vld [vmem:[%s0 + $0x48] sm:$0xff]
    %v79 = vld [vmem:[%s0 + $0x50] sm:$0xff]
    %v80 = vld [vmem:[%s0 + $0x58] sm:$0xff]
    %v81 = vld [vmem:[%s0 + $0x60] sm:$0xff]
    %v82 = vld [vmem:[%s0 + $0x68] sm:$0xff]
    %v83 = vld [vmem:[%s0 + $0x70] sm:$0xff]
    %v84 = vld [vmem:[%s0 + $0x78] sm:$0xff]
    %v85 = vld [vmem:[%s0 + $0x80] sm:$0xff]
    %v86 = vld [vmem:[%s0 + $0x88] sm:$0xff]
    %v87 = vld [vmem:[%s0 + $0x90] sm:$0xff]
    %v88 = vld [vmem:[%s0 + $0x98] sm:$0xff]
    %v89 = vld [vmem:[%s0 + $0xa0] sm:$0xff]
    %v90 = vld [vmem:[%s0 + $0xa8] sm:$0xff]
    %v91 = vld [vmem:[%s0 + $0xb0] sm:$0xff]
    %v92 = vld [vmem:[%s0 + $0xb8] sm:$0xff]
    %v93 = vld [vmem:[%s0 + $0xc0] sm:$0xff]
    %v94 = vld [vmem:[%s0 + $0xc8] sm:$0xff]
    %v95 = vld [vmem:[%s0 + $0xd0] sm:$0xff]
    %v96 = vld [vmem:[%s0 + $0xd8] sm:$0xff]
    %v97 = vld [vmem:[%s0 + $0xe0] sm:$0xff]
    %v98 = vld [vmem:[%s0 + $0xe8] sm:$0xff]
    %v99 = vld [vmem:[%s0 + $0xf0] sm:$0xff]
    %v100 = vld [vmem:[%s0 + $0xf8] sm:$0xff]
    %v133 = vunpack.c.l.b16 %v69
    %v134 = vunpack.c.h.b16 %v69
    %v135 = vunpack.c.l.b16 %v70
    %v136 = vunpack.c.h.b16 %v70
    %v137 = vunpack.c.l.b16 %v71
    %v138 = vunpack.c.h.b16 %v71
    %v139 = vunpack.c.l.b16 %v72
    %v140 = vunpack.c.h.b16 %v72
    %v141 = vunpack.c.l.b16 %v73
    %v142 = vunpack.c.h.b16 %v73
    %v143 = vunpack.c.l.b16 %v74
    %v144 = vunpack.c.h.b16 %v74
    %v145 = vunpack.c.l.b16 %v75
    %v146 = vunpack.c.h.b16 %v75
    %v147 = vunpack.c.l.b16 %v76
    %v148 = vunpack.c.h.b16 %v76
    %v149 = vunpack.c.l.b16 %v77
    %v150 = vunpack.c.h.b16 %v77
    %v151 = vunpack.c.l.b16 %v78
    %v152 = vunpack.c.h.b16 %v78
    %v153 = vunpack.c.l.b16 %v79
    %v154 = vunpack.c.h.b16 %v79
    %v155 = vunpack.c.l.b16 %v80
    %v156 = vunpack.c.h.b16 %v80
    %v157 = vunpack.c.l.b16 %v81
    %v158 = vunpack.c.h.b16 %v81
    %v159 = vunpack.c.l.b16 %v82
    %v160 = vunpack.c.h.b16 %v82
    %v161 = vunpack.c.l.b16 %v83
    %v162 = vunpack.c.h.b16 %v83
    %v163 = vunpack.c.l.b16 %v84
    %v164 = vunpack.c.h.b16 %v84
    %v165 = vunpack.c.l.b16 %v85
    %v166 = vunpack.c.h.b16 %v85
    %v167 = vunpack.c.l.b16 %v86
    %v168 = vunpack.c.h.b16 %v86
    %v169 = vunpack.c.l.b16 %v87
    %v170 = vunpack.c.h.b16 %v87
    %v171 = vunpack.c.l.b16 %v88
    %v172 = vunpack.c.h.b16 %v88
    %v173 = vunpack.c.l.b16 %v89
    %v174 = vunpack.c.h.b16 %v89
    %v175 = vunpack.c.l.b16 %v90
    %v176 = vunpack.c.h.b16 %v90
    %v177 = vunpack.c.l.b16 %v91
    %v178 = vunpack.c.h.b16 %v91
    %v179 = vunpack.c.l.b16 %v92
    %v180 = vunpack.c.h.b16 %v92
    %v181 = vunpack.c.l.b16 %v93
    %v182 = vunpack.c.h.b16 %v93
    %v183 = vunpack.c.l.b16 %v94
    %v184 = vunpack.c.h.b16 %v94
    %v185 = vunpack.c.l.b16 %v95
    %v186 = vunpack.c.h.b16 %v95
    %v187 = vunpack.c.l.b16 %v96
    %v188 = vunpack.c.h.b16 %v96
    %v189 = vunpack.c.l.b16 %v97
    %v190 = vunpack.c.h.b16 %v97
    %v191 = vunpack.c.l.b16 %v98
    %v192 = vunpack.c.h.b16 %v98
    %v193 = vunpack.c.l.b16 %v99
    %v194 = vunpack.c.h.b16 %v99
    %v195 = vunpack.c.l.b16 %v100
    %v196 = vunpack.c.h.b16 %v100
    %v197 = vpack.c.b16 %v137, %v133
    %v198 = vpack.c.b16 %v138, %v134
    %v199 = vpack.c.b16 %v139, %v135
    %v200 = vpack.c.b16 %v140, %v136
    %v201 = vpack.c.b16 %v145, %v141
    %v202 = vpack.c.b16 %v146, %v142
    %v203 = vpack.c.b16 %v147, %v143
    %v204 = vpack.c.b16 %v148, %v144
    %v205 = vpack.c.b16 %v153, %v149
    %v206 = vpack.c.b16 %v154, %v150
    %v207 = vpack.c.b16 %v155, %v151
    %v208 = vpack.c.b16 %v156, %v152
    %v209 = vpack.c.b16 %v161, %v157
    %v210 = vpack.c.b16 %v162, %v158
    %v211 = vpack.c.b16 %v163, %v159
    %v212 = vpack.c.b16 %v164, %v160
    %v213 = vpack.c.b16 %v169, %v165
    %v214 = vpack.c.b16 %v170, %v166
    %v215 = vpack.c.b16 %v171, %v167
    %v216 = vpack.c.b16 %v172, %v168
    %v217 = vpack.c.b16 %v177, %v173
    %v218 = vpack.c.b16 %v178, %v174
    %v219 = vpack.c.b16 %v179, %v175
    %v220 = vpack.c.b16 %v180, %v176
    %v221 = vpack.c.b16 %v185, %v181
    %v222 = vpack.c.b16 %v186, %v182
    %v223 = vpack.c.b16 %v187, %v183
    %v224 = vpack.c.b16 %v188, %v184
    %v225 = vpack.c.b16 %v193, %v189
    %v226 = vpack.c.b16 %v194, %v190
    %v227 = vpack.c.b16 %v195, %v191
    %v228 = vpack.c.b16 %v196, %v192
    %261 = vmatprep.subr.bf16.mxu0 %v198
    %262 = vmatpush1.bf16.msra.mxu0 %v197
    %263 = vmatprep.subr.bf16.mxu0 %v202
    %264 = vmatpush1.bf16.msra.mxu0 %v201
    %265 = vmatprep.subr.bf16.mxu0 %v206
    %266 = vmatpush1.bf16.msra.mxu0 %v205
    %267 = vmatprep.subr.bf16.mxu0 %v210
    %268 = vmatpush1.bf16.msra.mxu0 %v209
    %269 = vmatprep.subr.bf16.mxu0 %v214
    %270 = vmatpush1.bf16.msra.mxu0 %v213
    %271 = vmatprep.subr.bf16.mxu0 %v218
    %272 = vmatpush1.bf16.msra.mxu0 %v217
    %273 = vmatprep.subr.bf16.mxu0 %v222
    %274 = vmatpush1.bf16.msra.mxu0 %v221
    %275 = vmatprep.subr.bf16.mxu0 %v226
    %276 = vmatpush1.bf16.msra.mxu0 %v225
    %277 = vmatprep.subr.bf16.mxu0 0
    %278 = vmatpush1.bf16.msra.mxu0 0
    %279 = vmatprep.subr.bf16.mxu0 0
    %280 = vmatpush1.bf16.msra.mxu0 0
    %281 = vmatprep.subr.bf16.mxu0 0
    %282 = vmatpush1.bf16.msra.mxu0 0
    %283 = vmatprep.subr.bf16.mxu0 0
    %284 = vmatpush1.bf16.msra.mxu0 0
    %285 = vmatprep.subr.bf16.mxu0 0
    %286 = vmatpush1.bf16.msra.mxu0 0
    %287 = vmatprep.subr.bf16.mxu0 0
    %288 = vmatpush1.bf16.msra.mxu0 0
    %289 = vmatprep.subr.bf16.mxu0 0
    %290 = vmatpush1.bf16.msra.mxu0 0
    %291 = vmatprep.subr.bf16.mxu0 0
    %292 = vmatpush1.bf16.msra.mxu0 0
    %293 = vmatprep.mubr.bf16.mxu0 0
    %294 = vmatmul.mubr.bf16.gmra.mrb[0].mxu0 %v68
    %v295 = vpop.f32.mrb[0].mxu0
    %v296 = vadd.f32 0.0, %v295
    %v297 = vpop.f32.mrb[0].mxu0
    %v298 = vadd.f32 0.0, %v297
    %v299 = vpop.f32.mrb[0].mxu0
    %v300 = vpop.f32.mrb[0].mxu0
    %301 = vdwg.mxu0
    %302 = vmatprep.subr.bf16.mxu0 %v200
    %303 = vmatpush1.bf16.msra.mxu0 %v199
    %304 = vmatprep.subr.bf16.mxu0 %v204
    %305 = vmatpush1.bf16.msra.mxu0 %v203
    %306 = vmatprep.subr.bf16.mxu0 %v208
    %307 = vmatpush1.bf16.msra.mxu0 %v207
    %308 = vmatprep.subr.bf16.mxu0 %v212
    %309 = vmatpush1.bf16.msra.mxu0 %v211
    %310 = vmatprep.subr.bf16.mxu0 %v216
    %311 = vmatpush1.bf16.msra.mxu0 %v215
    %312 = vmatprep.subr.bf16.mxu0 %v220
    %313 = vmatpush1.bf16.msra.mxu0 %v219
    %314 = vmatprep.subr.bf16.mxu0 %v224
    %315 = vmatpush1.bf16.msra.mxu0 %v223
    %316 = vmatprep.subr.bf16.mxu0 %v228
    %317 = vmatpush1.bf16.msra.mxu0 %v227
    %318 = vmatprep.subr.bf16.mxu0 0
    %319 = vmatpush1.bf16.msra.mxu0 0
    %320 = vmatprep.subr.bf16.mxu0 0
    %321 = vmatpush1.bf16.msra.mxu0 0
    %322 = vmatprep.subr.bf16.mxu0 0
    %323 = vmatpush1.bf16.msra.mxu0 0
    %324 = vmatprep.subr.bf16.mxu0 0
    %325 = vmatpush1.bf16.msra.mxu0 0
    %326 = vmatprep.subr.bf16.mxu0 0
    %327 = vmatpush1.bf16.msra.mxu0 0
    %328 = vmatprep.subr.bf16.mxu0 0
    %329 = vmatpush1.bf16.msra.mxu0 0
    %330 = vmatprep.subr.bf16.mxu0 0
    %331 = vmatpush1.bf16.msra.mxu0 0
    %332 = vmatprep.subr.bf16.mxu0 0
    %333 = vmatpush1.bf16.msra.mxu0 0
    %334 = vmatprep.mubr.bf16.mxu0 0
    %335 = vmatmul.mubr.bf16.gmra.mrb[0].mxu0 %v68
    %v336 = vpop.f32.mrb[0].mxu0
    %v337 = vadd.f32 0.0, %v336
    %v338 = vpop.f32.mrb[0].mxu0
    %v339 = vadd.f32 0.0, %v338
    %v340 = vpop.f32.mrb[0].mxu0
    %v341 = vpop.f32.mrb[0].mxu0
    %342 = vdwg.mxu0
    %v343 = vmul.f32 %v296, 0.5
    %v344 = vmul.f32 %v298, 0.5
    %v345 = vmul.f32 %v337, 0.5
    %v346 = vmul.f32 %v339, 0.5
    %v347 = vmul.f32 %v296, 0.70710677
    %v348 = vmul.f32 %v298, 0.70710677
    %v349 = vmul.f32 %v337, 0.70710677
    %v350 = vmul.f32 %v339, 0.70710677
    %vm351 = vcmp.ge.f32.partialorder %v347, 0.0
    %vm352 = vcmp.ge.f32.partialorder %v348, 0.0
    %vm353 = vcmp.ge.f32.partialorder %v349, 0.0
    %vm354 = vcmp.ge.f32.partialorder %v350, 0.0
    %v355 = vsel %vm351, 1.0, -1.0
    %v356 = vsel %vm352, 1.0, -1.0
    %v357 = vsel %vm353, 1.0, -1.0
    %v358 = vsel %vm354, 1.0, -1.0
    %v359 = vand.u32 2147483647, %v347
    %v360 = vand.u32 2147483647, %v348
    %v361 = vand.u32 2147483647, %v349
    %v362 = vand.u32 2147483647, %v350
    %v363 = vmul.f32 %v359, 0.3275911
    %v364 = vmul.f32 %v360, 0.3275911
    %v365 = vmul.f32 %v361, 0.3275911
    %v366 = vmul.f32 %v362, 0.3275911
    %v367 = vadd.f32 %v363, 1.0
    %v368 = vadd.f32 %v364, 1.0
    %v369 = vadd.f32 %v365, 1.0
    %v370 = vadd.f32 %v366, 1.0
    %v371 = vrcp.pop %v367
    %v372 = vmul.f32 1.0, %v371
    %v373 = vrcp.pop %v368
    %v374 = vmul.f32 1.0, %v373
    %v375 = vrcp.pop %v369
    %v376 = vmul.f32 1.0, %v375
    %v377 = vrcp.pop %v370
    %v378 = vmul.f32 1.0, %v377
    %v379 = vmul.f32 %v372, 1.0614054
    %v380 = vmul.f32 %v374, 1.0614054
    %v381 = vmul.f32 %v376, 1.0614054
    %v382 = vmul.f32 %v378, 1.0614054
    %v383 = vadd.f32 %v379, -1.4531521
    %v384 = vadd.f32 %v380, -1.4531521
    %v385 = vadd.f32 %v381, -1.4531521
    %v386 = vadd.f32 %v382, -1.4531521
    %v387 = vmul.f32 %v383, %v372
    %v388 = vmul.f32 %v384, %v374
    %v389 = vmul.f32 %v385, %v376
    %v390 = vmul.f32 %v386, %v378
    %v391 = vadd.f32 %v387, 1.4214138
    %v392 = vadd.f32 %v388, 1.4214138
    %v393 = vadd.f32 %v389, 1.4214138
    %v394 = vadd.f32 %v390, 1.4214138
    %v395 = vmul.f32 %v391, %v372
    %v396 = vmul.f32 %v392, %v374
    %v397 = vmul.f32 %v393, %v376
    %v398 = vmul.f32 %v394, %v378
    %v399 = vadd.f32 %v395, -0.28449672
    %v400 = vadd.f32 %v396, -0.28449672
    %v401 = vadd.f32 %v397, -0.28449672
    %v402 = vadd.f32 %v398, -0.28449672
    %v403 = vmul.f32 %v399, %v372
    %v404 = vmul.f32 %v400, %v374
    %v405 = vmul.f32 %v401, %v376
    %v406 = vmul.f32 %v402, %v378
    %v407 = vadd.f32 %v403, 0.2548296
    %v408 = vadd.f32 %v404, 0.2548296
    %v409 = vadd.f32 %v405, 0.2548296
    %v410 = vadd.f32 %v406, 0.2548296
    %v411 = vmul.f32 %v407, %v372
    %v412 = vmul.f32 %v408, %v374
    %v413 = vmul.f32 %v409, %v376
    %v414 = vmul.f32 %v410, %v378
    %v415 = vsub.f32 0.0, %v359
    %v416 = vsub.f32 0.0, %v360
    %v417 = vsub.f32 0.0, %v361
    %v418 = vsub.f32 0.0, %v362
    %v419 = vmul.f32 %v415, %v359
    %v420 = vmul.f32 %v416, %v360
    %v421 = vmul.f32 %v417, %v361
    %v422 = vmul.f32 %v418, %v362
    %v423 = vmul.f32 %v419, 1.442695
    %v424 = vpow.pop %v423
    %v425 = vmul.f32 %v420, 1.442695
    %v426 = vpow.pop %v425
    %v427 = vmul.f32 %v421, 1.442695
    %v428 = vpow.pop %v427
    %v429 = vmul.f32 %v422, 1.442695
    %v430 = vpow.pop %v429
    %v431 = vmul.f32 %v411, %v424
    %v432 = vmul.f32 %v412, %v426
    %v433 = vmul.f32 %v413, %v428
    %v434 = vmul.f32 %v414, %v430
    %v435 = vsub.f32 1.0, %v431
    %v436 = vsub.f32 1.0, %v432
    %v437 = vsub.f32 1.0, %v433
    %v438 = vsub.f32 1.0, %v434
    %v439 = vmul.f32 %v355, %v435
    %v440 = vmul.f32 %v356, %v436
    %v441 = vmul.f32 %v357, %v437
    %v442 = vmul.f32 %v358, %v438
    %v443 = vadd.f32 %v439, 1.0
    %v444 = vadd.f32 %v440, 1.0
    %v445 = vadd.f32 %v441, 1.0
    %v446 = vadd.f32 %v442, 1.0
    %v447 = vmul.f32 %v343, %v443
    %v448 = vmul.f32 %v344, %v444
    %v449 = vmul.f32 %v345, %v445
    %v450 = vmul.f32 %v346, %v446
    %v451 = vpack.c.bf16 %v447, %v447
    %v452 = vpack.c.bf16 %v448, %v448
    %v453 = vpack.c.bf16 %v449, %v449
    %v454 = vpack.c.bf16 %v450, %v450
    %v455 = vld [vmem:[%s1] sm:$0xff]
    %v456 = vld [vmem:[%s1 + $0x8] sm:$0xff]
    %v457 = vld [vmem:[%s1 + $0x10] sm:$0xff]
    %v458 = vld [vmem:[%s1 + $0x18] sm:$0xff]
    %v459 = vld [vmem:[%s2] sm:$0x1]
    %v461 = vlaneseq
    %v462 = vshrl.u32 %v461, 7
    %v463 = vsub.s32 0, %v462
    %v464 = vrot.slane %v459, %v463
    %v470 = vunpack.c.l.b16 %v455
    %v471 = vunpack.c.h.b16 %v455
    %v472 = vunpack.c.l.b16 %v456
    %v473 = vunpack.c.h.b16 %v456
    %v474 = vunpack.c.l.b16 %v457
    %v475 = vunpack.c.h.b16 %v457
    %v476 = vunpack.c.l.b16 %v458
    %v477 = vunpack.c.h.b16 %v458
    %v478 = vpack.c.b16 %v474, %v470
    %v479 = vpack.c.b16 %v475, %v471
    %v480 = vpack.c.b16 %v476, %v472
    %v481 = vpack.c.b16 %v477, %v473
    %486 = vmatprep.subr.bf16.mxu0 %v479
    %487 = vmatpush1.bf16.xpose.msra.mxu0 %v478
    %488 = vmatprep.subr.bf16.mxu0 0
    %489 = vmatpush1.bf16.xpose.msra.mxu0 0
    %490 = vmatprep.subr.bf16.mxu0 0
    %491 = vmatpush1.bf16.xpose.msra.mxu0 0
    %492 = vmatprep.subr.bf16.mxu0 0
    %493 = vmatpush1.bf16.xpose.msra.mxu0 0
    %494 = vmatprep.subr.bf16.mxu0 0
    %495 = vmatpush1.bf16.xpose.msra.mxu0 0
    %496 = vmatprep.subr.bf16.mxu0 0
    %497 = vmatpush1.bf16.xpose.msra.mxu0 0
    %498 = vmatprep.subr.bf16.mxu0 0
    %499 = vmatpush1.bf16.xpose.msra.mxu0 0
    %500 = vmatprep.subr.bf16.mxu0 0
    %501 = vmatpush1.bf16.xpose.msra.mxu0 0
    %502 = vmatprep.subr.bf16.mxu0 0
    %503 = vmatpush1.bf16.xpose.msra.mxu0 0
    %504 = vmatprep.subr.bf16.mxu0 0
    %505 = vmatpush1.bf16.xpose.msra.mxu0 0
    %506 = vmatprep.subr.bf16.mxu0 0
    %507 = vmatpush1.bf16.xpose.msra.mxu0 0
    %508 = vmatprep.subr.bf16.mxu0 0
    %509 = vmatpush1.bf16.xpose.msra.mxu0 0
    %510 = vmatprep.subr.bf16.mxu0 0
    %511 = vmatpush1.bf16.xpose.msra.mxu0 0
    %512 = vmatprep.subr.bf16.mxu0 0
    %513 = vmatpush1.bf16.xpose.msra.mxu0 0
    %514 = vmatprep.subr.bf16.mxu0 0
    %515 = vmatpush1.bf16.xpose.msra.mxu0 0
    %516 = vmatprep.subr.bf16.mxu0 0
    %517 = vmatpush1.bf16.xpose.msra.mxu0 0
    %518 = vmatprep.mubr.bf16.mxu0 %v452
    %519 = vmatmul.mubr.bf16.gmra.mrb[0].mxu0 %v451
    %v520 = vpop.f32.mrb[0].mxu0
    %v521 = vadd.f32 %v464, %v520
    %v522 = vpop.f32.mrb[0].mxu0
    %v523 = vpop.f32.mrb[0].mxu0
    %v524 = vpop.f32.mrb[0].mxu0
    %525 = vdwg.mxu0
    %526 = vmatprep.subr.bf16.mxu0 %v481
    %527 = vmatpush1.bf16.xpose.msra.mxu0 %v480
    %528 = vmatprep.subr.bf16.mxu0 0
    %529 = vmatpush1.bf16.xpose.msra.mxu0 0
    %530 = vmatprep.subr.bf16.mxu0 0
    %531 = vmatpush1.bf16.xpose.msra.mxu0 0
    %532 = vmatprep.subr.bf16.mxu0 0
    %533 = vmatpush1.bf16.xpose.msra.mxu0 0
    %534 = vmatprep.subr.bf16.mxu0 0
    %535 = vmatpush1.bf16.xpose.msra.mxu0 0
    %536 = vmatprep.subr.bf16.mxu0 0
    %537 = vmatpush1.bf16.xpose.msra.mxu0 0
    %538 = vmatprep.subr.bf16.mxu0 0
    %539 = vmatpush1.bf16.xpose.msra.mxu0 0
    %540 = vmatprep.subr.bf16.mxu0 0
    %541 = vmatpush1.bf16.xpose.msra.mxu0 0
    %542 = vmatprep.subr.bf16.mxu0 0
    %543 = vmatpush1.bf16.xpose.msra.mxu0 0
    %544 = vmatprep.subr.bf16.mxu0 0
    %545 = vmatpush1.bf16.xpose.msra.mxu0 0
    %546 = vmatprep.subr.bf16.mxu0 0
    %547 = vmatpush1.bf16.xpose.msra.mxu0 0
    %548 = vmatprep.subr.bf16.mxu0 0
    %549 = vmatpush1.bf16.xpose.msra.mxu0 0
    %550 = vmatprep.subr.bf16.mxu0 0
    %551 = vmatpush1.bf16.xpose.msra.mxu0 0
    %552 = vmatprep.subr.bf16.mxu0 0
    %553 = vmatpush1.bf16.xpose.msra.mxu0 0
    %554 = vmatprep.subr.bf16.mxu0 0
    %555 = vmatpush1.bf16.xpose.msra.mxu0 0
    %556 = vmatprep.subr.bf16.mxu0 0
    %557 = vmatpush1.bf16.xpose.msra.mxu0 0
    %558 = vmatprep.mubr.bf16.mxu0 %v454
    %559 = vmatmul.mubr.bf16.gmra.mrb[0].mxu0 %v453
    %v560 = vpop.f32.mrb[0].mxu0
    %v561 = vadd.f32 %v521, %v560
    %v562 = vpop.f32.mrb[0].mxu0
    %v563 = vpop.f32.mrb[0].mxu0
    %v564 = vpop.f32.mrb[0].mxu0
    %565 = vdwg.mxu0
    %v566 = vlaneseq
    %v567 = vand.u32 %v566, 127
    %vm568 = vcmp.lt.s32.totalorder %v567, 10
    %v569 = vsel %vm568, %v561, -1e+30
    %vm570 = vcmask 123904
    %v571 = vsel %vm570, %v569, -inf
    %572 = vmax.xlane.f32.xlu0 %v571
    %v573 = vpop.xlane.xlu0 %572
    %v574 = vsub.f32 %v569, %v573
    %v575 = vmul.f32 %v574, 1.442695
    %v576 = vpow.pop %v575
    %v577 = vsel %vm570, %v576, 0.0
    %578 = vadd.xlane.f32.xlu0 %v577
    %v579 = vpop.xlane.xlu0 %578
    %v580 = vrcp.pop %v579
    %v581 = vmul.f32 %v576, %v580
    %582 = vst.msk [vmem:[#allocation7] sm:$0x3] %vm570, %v581
    // Predicated region
    $region26: #{tsd_classifier_forward.2} parent=1 // pred_check
      _
    $region27: #{tsd_classifier_forward.2} parent=1 // pred_check_branch
      %584 = sbr.rel (0) target = $region29
    $region28: #{tsd_classifier_forward.2} parent=1 // pred_region
      %s586 = ssub.s32 32, 32
      %587 = vsyncadd [#allocation8], %s586
      %s589 = sshll.u32 [#allocation7], 4
      %s590 = int_to_ptr.vmem [resolvable:$true] %s589
      %592 = dma.vmem_to_hbm [thread:$0]  %s590, 32, %s7, [#allocation8]
    $region29: #{tsd_classifier_forward.2} parent=1 // pred_fallthru
      _
    // Predicated region
    $region30: #{tsd_classifier_forward.2} parent=1 // pred_check
      _
    $region31: #{tsd_classifier_forward.2} parent=1 // pred_check_branch
      %594 = sbr.rel (0) target = $region33
    $region32: #{tsd_classifier_forward.2} parent=1 // pred_region
      %595 = dma.done [#allocation8], 32
    $region33: #{tsd_classifier_forward.2} parent=1 // pred_fallthru
      _
    %596 = vsyncpa [#allocation8], 1

</llo_original>
